<compile_context>
chip_gen: v6e
topology: v6e:2x2x1
jax: 0.10.0
libtpu: 0.0.40
codegen_flags: <defaults>
</compile_context>

<pallas_src>
import functools

import jax
import jax.numpy as jnp
from jax.experimental import pallas as pl
from jax.experimental.pallas import tpu as pltpu

EPS = 1e-5
_LANE = 128
_SUBLANE = 8
_MAX_TM = 1024          # row-tile benefit saturates around 512-1024 rows
_F32_TEMP_BYTES = 16    # x_f32, x*x, x_hat, f32 matmul accumulator per (row, lane)


def _round_up(n, m):
    return ((n + m - 1) // m) * m


def _vmem_budget_bytes():
    """Per-generation scoped-VMEM limit and tile budget."""
    try:
        cap = int(pltpu.get_tpu_info().vmem_capacity_bytes)
    except Exception:  # query unavailable -> conservative (v7x-sized) default
        cap = 64 * 1024 * 1024
    if cap >= 96 * 1024 * 1024:                      # v5e / v6e: 128 MiB physical
        return 100 * 1024 * 1024, 80 * 1024 * 1024
    return 48 * 1024 * 1024, 40 * 1024 * 1024        # v7x: 64 MiB physical


def _choose_tm(rows, d_pad, x_itemsize, w_itemsize, tile_budget):
    """Pick a row-tile size: as big as possible within the (correct) VMEM budget."""
    # Pallas double-buffers every input (even with a constant index_map), so the
    # resident weight + bias cost 2x their size.
    resident = 2 * d_pad * d_pad * w_itemsize + 2 * d_pad * 4
    # Per (row, lane): double-buffered input tile + double-buffered output tile
    # plus ~16 B of f32 intermediates materialized inside the kernel body.
    per_row = d_pad * (2 * x_itemsize + 2 * x_itemsize + _F32_TEMP_BYTES)
    avail = tile_budget - resident
    if avail < per_row * _SUBLANE:
        # TODO(synk): K/N-tiled fallback (see header) instead of erroring out.
        raise ValueError(
            f"weight ({d_pad}x{d_pad}, {w_itemsize} B/elem) does not fit the VMEM "
            f"tile budget ({tile_budget} B); K/N tiling not implemented yet")
    tm = (avail // per_row // _SUBLANE) * _SUBLANE
    tm = max(_SUBLANE, min(_MAX_TM, tm))
    tm = min(tm, _round_up(rows, _SUBLANE))
    return int(tm)


def _make_kernel(d_true):
    inv_d = 1.0 / float(d_true)

    def kernel(x_ref, w_ref, b_ref, o_ref):
        # x_ref: (TM, d_pad); w_ref: (d_pad, d_pad) gamma-folded weight;
        # b_ref: (1, d_pad) f32 beta-folded bias.  Padded lanes of x and padded
        # rows/cols of w are zero, so no masking is needed anywhere.
        x = x_ref[...].astype(jnp.float32)

        # One-pass LayerNorm statistics (zero-padded lanes contribute nothing).
        mean = jnp.sum(x, axis=-1, keepdims=True) * inv_d
        var = jnp.sum(x * x, axis=-1, keepdims=True) * inv_d - mean * mean
        var = jnp.maximum(var, 0.0)                       # cancellation guard
        x_hat = (x - mean) * jax.lax.rsqrt(var + EPS)

        # fn: Linear(dim, dim) on the MXU; gamma/beta already folded into w/b.
        out = jnp.dot(x_hat.astype(w_ref.dtype), w_ref[...],
                      preferred_element_type=jnp.float32)
        o_ref[...] = (out + b_ref[...]).astype(o_ref.dtype)

    return kernel


@functools.partial(jax.jit, static_argnames=("tm", "mxu_dtype"))
def prenorm_linear(x, gamma, beta, w, b, *, tm=None, mxu_dtype=None):
    """Fused PreNorm(dim, Linear(dim, dim)): out = LayerNorm(x) @ W + b.

    x: (B, S, D); gamma/beta: (D,); w: (D, D) [in_features, out_features]; b: (D,).
    mxu_dtype: optional matmul dtype (e.g. jnp.bfloat16 on v5e); default = x.dtype.
    """
    B, S, D = x.shape
    rows = B * S
    d_pad = _round_up(D, _LANE)
    # TODO(synk): when compute-bound on v6e/v7x and D pads to an odd multiple of
    # 128, padding to a multiple of 256 feeds the 2x256^2 MXU better.

    mat_dtype = jnp.dtype(mxu_dtype) if mxu_dtype is not None else jnp.dtype(x.dtype)
    vmem_limit, tile_budget = _vmem_budget_bytes()
    if tm is None:
        tm = _choose_tm(rows, d_pad, jnp.dtype(x.dtype).itemsize,
                        mat_dtype.itemsize, tile_budget)
    n_tiles = pl.cdiv(rows, tm)

    # Fold the LayerNorm affine into the linear layer (all folding in f32):
    #   (x_hat*gamma + beta) @ W + b == x_hat @ (gamma[:,None]*W) + (beta@W + b)
    wf = w.astype(jnp.float32)
    w_fold = gamma.astype(jnp.float32)[:, None] * wf
    b_fold = beta.astype(jnp.float32) @ wf + b.astype(jnp.float32)

    # Lane padding only.  Rows are NOT padded: the partial last row-block is
    # handled by Pallas and its out-of-range rows are never written back.
    x2d = x.reshape(rows, D)
    if d_pad != D:
        x2d = jnp.pad(x2d, ((0, 0), (0, d_pad - D)))
        w_fold = jnp.pad(w_fold, ((0, d_pad - D), (0, d_pad - D)))
        b_fold = jnp.pad(b_fold, (0, d_pad - D))
    w2d = w_fold.astype(mat_dtype)
    b2d = b_fold.reshape(1, d_pad)          # stays f32 (added to f32 accumulator)

    itemsize = jnp.dtype(x.dtype).itemsize
    cost = pl.CostEstimate(
        flops=2 * rows * d_pad * d_pad,
        transcendentals=0,
        bytes_accessed=rows * d_pad * 2 * itemsize + d_pad * d_pad * mat_dtype.itemsize,
    )

    out2d = pl.pallas_call(
        _make_kernel(D),
        out_shape=jax.ShapeDtypeStruct((rows, d_pad), x.dtype),
        grid_spec=pltpu.PrefetchScalarGridSpec(
            num_scalar_prefetch=0,
            grid=(n_tiles,),
            in_specs=[
                pl.BlockSpec((tm, d_pad), lambda i: (i, 0)),      # x (row-tiled)
                pl.BlockSpec((d_pad, d_pad), lambda i: (0, 0)),   # folded W (resident)
                pl.BlockSpec((1, d_pad), lambda i: (0, 0)),       # folded bias (resident)
            ],
            out_specs=pl.BlockSpec((tm, d_pad), lambda i: (i, 0)),
        ),
        compiler_params=pltpu.CompilerParams(
            dimension_semantics=("parallel",),
            vmem_limit_bytes=vmem_limit,
        ),
        cost_estimate=cost,
    )(x2d, w2d, b2d)

    if d_pad != D:
        out2d = out2d[:, :D]
    return out2d.reshape(B, S, D)


def prenorm_linear_ref(x, gamma, beta, w, b):
    """Pure-JAX reference mirroring fn(nn.LayerNorm(dim)(x)) with fn = Linear."""
    xf = x.astype(jnp.float32)
    mean = jnp.mean(xf, axis=-1, keepdims=True)
    var = jnp.mean((xf - mean) ** 2, axis=-1, keepdims=True)
    x_hat = (xf - mean) / jnp.sqrt(var + EPS)
    y = x_hat * gamma.astype(jnp.float32) + beta.astype(jnp.float32)
    out = y @ w.astype(jnp.float32) + b.astype(jnp.float32)
    return out.astype(x.dtype)


if __name__ == "__main__":
    key = jax.random.PRNGKey(0)

    def make_params(D, kk):
        k2, k3 = jax.random.split(kk)
        gamma = jnp.ones((D,), jnp.float32) + 0.01 * jnp.arange(D, dtype=jnp.float32)
        beta = 0.001 * jnp.arange(D, dtype=jnp.float32)
        w = jax.random.normal(k2, (D, D), dtype=jnp.float32) / jnp.sqrt(D)
        b = jax.random.normal(k3, (D,), dtype=jnp.float32) * 0.02
        return gamma, beta, w, b

    # 1) f32, dim consistent with the Net's ViT (dim = in_cha = 32).
    k1, kp, key = jax.random.split(key, 3)
    B, S, D = 2, 8, 32
    x = jax.random.normal(k1, (B, S, D), dtype=jnp.float32)
    gamma, beta, w, b = make_params(D, kp)
    out = prenorm_linear(x, gamma, beta, w, b)
    jax.block_until_ready(out)
    ref = prenorm_linear_ref(x, gamma, beta, w, b)
    assert out.shape == (B, S, D)
    assert jnp.allclose(out, ref, atol=1e-4, rtol=1e-4), "f32 mismatch vs reference"

    # 2) f32, ragged row count + forced small tile -> exercises the partial
    #    last row-block (no wrapper-side row padding anymore).
    k1, kp, key = jax.random.split(key, 3)
    B, S, D = 3, 5, 32
    x = jax.random.normal(k1, (B, S, D), dtype=jnp.float32)
    gamma, beta, w, b = make_params(D, kp)
    out = prenorm_linear(x, gamma, beta, w, b, tm=8)
    jax.block_until_ready(out)
    ref = prenorm_linear_ref(x, gamma, beta, w, b)
    assert jnp.allclose(out, ref, atol=1e-4, rtol=1e-4), "partial-block mismatch"

    # 3) bf16 activations (bf16 MXU path) with a ragged lane dim (48 -> 128 pad).
    k1, kp, key = jax.random.split(key, 3)
    B, S, D = 2, 8, 48
    x = jax.random.normal(k1, (B, S, D), dtype=jnp.float32).astype(jnp.bfloat16)
    gamma, beta, w, b = make_params(D, kp)
    out = prenorm_linear(x, gamma, beta, w, b)
    jax.block_until_ready(out)
    ref = prenorm_linear_ref(x, gamma, beta, w, b)
    assert out.dtype == jnp.bfloat16
    assert jnp.allclose(out.astype(jnp.float32), ref.astype(jnp.float32),
                        atol=5e-2, rtol=5e-2), "bf16 mismatch vs reference"

    print("KERNEL_OK")
</pallas_src>

<mosaic_0001>
module attributes {stable_mosaic.version = 11 : i64} {
  func.func @kernel(%arg0: i32, %arg1: memref<16x128xf32, #tpu.memory_space<vmem>>, %arg2: memref<128x128xf32, #tpu.memory_space<vmem>>, %arg3: memref<1x128xf32, #tpu.memory_space<vmem>>, %arg4: memref<16x128xf32, #tpu.memory_space<vmem>>) attributes {dimension_semantics = [#tpu.dimension_semantics<parallel>], iteration_bounds = array<i64: 1>, scalar_prefetch = 0 : i64, scratch_operands = 0 : i64, tpu.core_type = #tpu.core_type<tc>, window_params = [{transform_indices = @transform_0, window_bounds = array<i64: 16, 128>}, {pipeline_mode = #tpu.pipeline_mode<synchronous>, transform_indices = @transform_1, window_bounds = array<i64: 128, 128>}, {pipeline_mode = #tpu.pipeline_mode<synchronous>, transform_indices = @transform_2, window_bounds = array<i64: 1, 128>}, {transform_indices = @transform_3, window_bounds = array<i64: 16, 128>}]} {
    %c0 = arith.constant 0 : index
    %c0_0 = arith.constant 0 : index
    %0 = vector.load %arg1[%c0, %c0_0] : memref<16x128xf32, #tpu.memory_space<vmem>>, vector<16x128xf32>
    %cst = arith.constant dense<0.000000e+00> : vector<16xf32>
    %1 = vector.multi_reduction <add>, %0, %cst [1] : vector<16x128xf32> to vector<16xf32>
    %2 = vector.shape_cast %1 : vector<16xf32> to vector<16x1xf32>
    %cst_1 = arith.constant 3.125000e-02 : f32
    %3 = vector.broadcast %cst_1 : f32 to vector<16x1xf32>
    %4 = arith.mulf %2, %3 : vector<16x1xf32>
    %5 = arith.mulf %0, %0 : vector<16x128xf32>
    %cst_2 = arith.constant dense<0.000000e+00> : vector<16xf32>
    %6 = vector.multi_reduction <add>, %5, %cst_2 [1] : vector<16x128xf32> to vector<16xf32>
    %7 = vector.shape_cast %6 : vector<16xf32> to vector<16x1xf32>
    %cst_3 = arith.constant 3.125000e-02 : f32
    %8 = vector.broadcast %cst_3 : f32 to vector<16x1xf32>
    %9 = arith.mulf %7, %8 : vector<16x1xf32>
    %10 = arith.mulf %4, %4 : vector<16x1xf32>
    %11 = arith.subf %9, %10 : vector<16x1xf32>
    %cst_4 = arith.constant 0.000000e+00 : f32
    %12 = vector.broadcast %cst_4 : f32 to vector<16x1xf32>
    %13 = arith.maximumf %11, %12 : vector<16x1xf32>
    %14 = vector.broadcast %4 : vector<16x1xf32> to vector<16x128xf32>
    %15 = arith.subf %0, %14 : vector<16x128xf32>
    %cst_5 = arith.constant 9.99999974E-6 : f32
    %16 = vector.broadcast %cst_5 : f32 to vector<16x1xf32>
    %17 = arith.addf %13, %16 : vector<16x1xf32>
    %18 = math.rsqrt %17 : vector<16x1xf32>
    %19 = vector.broadcast %18 : vector<16x1xf32> to vector<16x128xf32>
    %20 = arith.mulf %15, %19 : vector<16x128xf32>
    %c0_6 = arith.constant 0 : index
    %c0_7 = arith.constant 0 : index
    %21 = vector.load %arg2[%c0_6, %c0_7] : memref<128x128xf32, #tpu.memory_space<vmem>>, vector<128x128xf32>
    %cst_8 = arith.constant dense<0.000000e+00> : vector<16x128xf32>
    %22 = tpu.matmul %20, %21, %cst_8 {dimension_numbers = #tpu.dot_dimension_numbers<[1], [0], [0], [1], [0, 0, 1, 1], [], []>} : vector<16x128xf32>, vector<128x128xf32>, vector<16x128xf32> -> vector<16x128xf32>
    %c0_9 = arith.constant 0 : index
    %c0_10 = arith.constant 0 : index
    %23 = vector.load %arg3[%c0_9, %c0_10] : memref<1x128xf32, #tpu.memory_space<vmem>>, vector<1x128xf32>
    %24 = vector.broadcast %23 : vector<1x128xf32> to vector<16x128xf32>
    %25 = arith.addf %22, %24 : vector<16x128xf32>
    %c0_11 = arith.constant 0 : index
    %c0_12 = arith.constant 0 : index
    %26 = vector.load %arg4[%c0_11, %c0_12] : memref<16x128xf32, #tpu.memory_space<vmem>>, vector<16x128xf32>
    tpu.vector_store %arg4[%c0_11, %c0_12], %25 {strides = array<i32>} : memref<16x128xf32, #tpu.memory_space<vmem>>, vector<16x128xf32>,
    return
  }
  func.func @transform_0(%arg0: i32) -> (i32, i32) {
    %c0_i32 = arith.constant 0 : i32
    %c0_i32_0 = arith.constant 0 : i32
    return %arg0, %c0_i32 : i32, i32
  }
  func.func @transform_1(%arg0: i32) -> (i32, i32) {
    %c0_i32 = arith.constant 0 : i32
    %c0_i32_0 = arith.constant 0 : i32
    %c0_i32_1 = arith.constant 0 : i32
    return %c0_i32, %c0_i32_0 : i32, i32
  }
  func.func @transform_2(%arg0: i32) -> (i32, i32) {
    %c0_i32 = arith.constant 0 : i32
    %c0_i32_0 = arith.constant 0 : i32
    %c0_i32_1 = arith.constant 0 : i32
    return %c0_i32, %c0_i32_0 : i32, i32
  }
  func.func @transform_3(%arg0: i32) -> (i32, i32) {
    %c0_i32 = arith.constant 0 : i32
    %c0_i32_0 = arith.constant 0 : i32
    return %arg0, %c0_i32 : i32, i32
  }
}

</mosaic_0001>

<llo_original>
// kernel: prenorm_linear.1
$region0: #{prenorm_linear.1}
  #allocation0 [shape = 'u32[]', space=smem, size = 0x4, offset = 0x4, fixed_abs, tag = 'smem constant byte address 0x4 - core index']
  #allocation1 [shape = 'u32[144,128]{1,0:T(1,128)}', space=vmem, size = 0x12000, scoped, tag = 'internal scratch']
  %s0 = inlined_call_operand.vmem [shape: f32[16,128], index: 0, kind: input, shape index: {}]
  %s1 = inlined_call_operand.vmem [shape: f32[128,128], index: 1, kind: input, shape index: {}]
  %s2 = inlined_call_operand.vmem [shape: f32[1,128], index: 2, kind: input, shape index: {}]
  %s3 = inlined_call_operand.vmem [shape: f32[16,128], index: 3, kind: output, shape index: {}]
  %s4 = sld [smem:[#allocation0]]
  $region22: #{prenorm_linear.1} parent=0
    _
  %s6 = ssub.s32 1, %s4
  %s7 = scalar_select 0, %s6, %s4
  // Predicated region
  $region2: #{prenorm_linear.1} parent=0 // pred_check
    _
  $region3: #{prenorm_linear.1} parent=0 // pred_check_branch
    %9 = sbr.rel (0) target = $region5
  $region4: #{prenorm_linear.1} parent=0 // pred_region
    _
  $region5: #{prenorm_linear.1} parent=0 // pred_fallthru
    _
  // Predicated region
  $region6: #{prenorm_linear.1} parent=0 // pred_check
    _
  $region7: #{prenorm_linear.1} parent=0 // pred_check_branch
    %11 = sbr.rel (0) target = $region9
  $region8: #{prenorm_linear.1} parent=0 // pred_region
    _
  $region9: #{prenorm_linear.1} parent=0 // pred_fallthru
    _
  // Predicated region
  $region10: #{prenorm_linear.1} parent=0 // pred_check
    _
  $region11: #{prenorm_linear.1} parent=0 // pred_check_branch
    %13 = sbr.rel (0) target = $region13
  $region12: #{prenorm_linear.1} parent=0 // pred_region
    _
  $region13: #{prenorm_linear.1} parent=0 // pred_fallthru
    _
  %v14 = vld [vmem:[%s0] sm:$0xff]
  %v15 = vld [vmem:[%s0 + $0x8] sm:$0xff]
  %16 = vadd.xlane.f32.xlu0 %v14
  %v17 = vpop.xlane.xlu0 %16
  %18 = vadd.xlane.f32.xlu0 %v15
  %v19 = vpop.xlane.xlu0 %18
  %v20 = vmul.f32 %v17, 0.03125
  %v21 = vmul.f32 %v19, 0.03125
  %v22 = vmul.f32 %v14, %v14
  %v23 = vmul.f32 %v15, %v15
  %24 = vadd.xlane.f32.xlu0 %v22
  %v25 = vpop.xlane.xlu0 %24
  %26 = vadd.xlane.f32.xlu0 %v23
  %v27 = vpop.xlane.xlu0 %26
  %v28 = vmul.f32 %v25, 0.03125
  %v29 = vmul.f32 %v27, 0.03125
  %v30 = vmul.f32 %v20, %v20
  %v31 = vmul.f32 %v21, %v21
  %v32 = vsub.f32 %v28, %v30
  %v33 = vsub.f32 %v29, %v31
  %v34 = vmax.f32 %v32, 0.0
  %v35 = vmax.f32 %v33, 0.0
  %v36 = vsub.f32 %v14, %v20
  %v37 = vsub.f32 %v15, %v21
  %v38 = vadd.f32 %v34, 1e-05
  %v39 = vadd.f32 %v35, 1e-05
  %v40 = vrsqrt.pop %v38
  %v41 = vrsqrt.pop %v39
  %v42 = vmul.f32 %v36, %v40
  %v43 = vmul.f32 %v37, %v41
  %v44 = vld [vmem:[%s1] sm:$0xff]
  %v45 = vld [vmem:[%s1 + $0x8] sm:$0xff]
  %v46 = vld [vmem:[%s1 + $0x10] sm:$0xff]
  %v47 = vld [vmem:[%s1 + $0x18] sm:$0xff]
  %v48 = vld [vmem:[%s1 + $0x20] sm:$0xff]
  %v49 = vld [vmem:[%s1 + $0x28] sm:$0xff]
  %v50 = vld [vmem:[%s1 + $0x30] sm:$0xff]
  %v51 = vld [vmem:[%s1 + $0x38] sm:$0xff]
  %v52 = vld [vmem:[%s1 + $0x40] sm:$0xff]
  %v53 = vld [vmem:[%s1 + $0x48] sm:$0xff]
  %v54 = vld [vmem:[%s1 + $0x50] sm:$0xff]
  %v55 = vld [vmem:[%s1 + $0x58] sm:$0xff]
  %v56 = vld [vmem:[%s1 + $0x60] sm:$0xff]
  %v57 = vld [vmem:[%s1 + $0x68] sm:$0xff]
  %v58 = vld [vmem:[%s1 + $0x70] sm:$0xff]
  %v59 = vld [vmem:[%s1 + $0x78] sm:$0xff]
  %v60 = vld [vmem:[%s2] sm:$0x1]
  %v62 = vlaneseq
  %v63 = vshrl.u32 %v62, 7
  %v64 = vsub.s32 0, %v63
  %v65 = vrot.slane %v60, %v64
  %67 = vmatprep.subr.mxu0 0.0
  %68 = vmatpush1.msra.mxu0 %v59
  %69 = vmatprep.subr.mxu0 0.0
  %70 = vmatpush1.msra.mxu0 %v58
  %71 = vmatprep.subr.mxu0 0.0
  %72 = vmatpush1.msra.mxu0 %v57
  %73 = vmatprep.subr.mxu0 0.0
  %74 = vmatpush1.msra.mxu0 %v56
  %75 = vmatprep.subr.mxu0 0.0
  %76 = vmatpush1.msra.mxu0 %v55
  %77 = vmatprep.subr.mxu0 0.0
  %78 = vmatpush1.msra.mxu0 %v54
  %79 = vmatprep.subr.mxu0 0.0
  %80 = vmatpush1.msra.mxu0 %v53
  %81 = vmatprep.subr.mxu0 0.0
  %82 = vmatpush1.msra.mxu0 %v52
  %83 = vmatprep.subr.mxu0 0.0
  %84 = vmatpush1.msra.mxu0 %v51
  %85 = vmatprep.subr.mxu0 0.0
  %86 = vmatpush1.msra.mxu0 %v50
  %87 = vmatprep.subr.mxu0 0.0
  %88 = vmatpush1.msra.mxu0 %v49
  %89 = vmatprep.subr.mxu0 0.0
  %90 = vmatpush1.msra.mxu0 %v48
  %91 = vmatprep.subr.mxu0 0.0
  %92 = vmatpush1.msra.mxu0 %v47
  %93 = vmatprep.subr.mxu0 0.0
  %94 = vmatpush1.msra.mxu0 %v46
  %95 = vmatprep.subr.mxu0 0.0
  %96 = vmatpush1.msra.mxu0 %v45
  %97 = vmatprep.subr.mxu0 0.0
  %98 = vmatpush1.msra.mxu0 %v44
  %99 = vmatprep.subr.mxu0 0.0
  %100 = vmatpush2.msra.mxu0 0.0
  %101 = vmatprep.subr.mxu0 0.0
  %102 = vmatpush2.msra.mxu0 0.0
  %103 = vmatprep.subr.mxu0 0.0
  %104 = vmatpush2.msra.mxu0 0.0
  %105 = vmatprep.subr.mxu0 0.0
  %106 = vmatpush2.msra.mxu0 0.0
  %107 = vmatprep.subr.mxu0 0.0
  %108 = vmatpush2.msra.mxu0 0.0
  %109 = vmatprep.subr.mxu0 0.0
  %110 = vmatpush2.msra.mxu0 0.0
  %111 = vmatprep.subr.mxu0 0.0
  %112 = vmatpush2.msra.mxu0 0.0
  %113 = vmatprep.subr.mxu0 0.0
  %114 = vmatpush2.msra.mxu0 0.0
  %115 = vmatprep.subr.mxu0 0.0
  %116 = vmatpush2.msra.mxu0 0.0
  %117 = vmatprep.subr.mxu0 0.0
  %118 = vmatpush2.msra.mxu0 0.0
  %119 = vmatprep.subr.mxu0 0.0
  %120 = vmatpush2.msra.mxu0 0.0
  %121 = vmatprep.subr.mxu0 0.0
  %122 = vmatpush2.msra.mxu0 0.0
  %123 = vmatprep.subr.mxu0 0.0
  %124 = vmatpush2.msra.mxu0 0.0
  %125 = vmatprep.subr.mxu0 0.0
  %126 = vmatpush2.msra.mxu0 0.0
  %127 = vmatprep.subr.mxu0 0.0
  %128 = vmatpush2.msra.mxu0 0.0
  %129 = vmatprep.subr.mxu0 0.0
  %130 = vmatpush2.msra.mxu0 0.0
  %131 = vmatprep.mubr.f32.mxu0 0.0
  %132 = vmatmul.mubr.f32.gmra.mxu0 %v42
  %v133 = vpop.f32.mrf.mxu0
  %v134 = vadd.f32 %v65, %v133
  %v135 = vpop.f32.mrf.mxu0
  %136 = vmatprep.mubr.f32.mxu0 0.0
  %137 = vmatmul.mubr.f32.gmra.mxu0 %v43
  %v138 = vpop.f32.mrf.mxu0
  %v139 = vadd.f32 %v65, %v138
  %v140 = vpop.f32.mrf.mxu0
  %141 = vdwg.mxu0
  %142 = vst [vmem:[%s3] sm:$0xff] %v134
  %143 = vst [vmem:[%s3 + $0x8] sm:$0xff] %v139
  // Predicated region
  $region14: #{prenorm_linear.1} parent=0 // pred_check
    _
  $region15: #{prenorm_linear.1} parent=0 // pred_check_branch
    %145 = sbr.rel (0) target = $region17
  $region16: #{prenorm_linear.1} parent=0 // pred_region
    _
  $region17: #{prenorm_linear.1} parent=0 // pred_fallthru
    _
  // Predicated region
  $region18: #{prenorm_linear.1} parent=0 // pred_check
    _
  $region19: #{prenorm_linear.1} parent=0 // pred_check_branch
    %147 = sbr.rel (0) target = $region21
  $region20: #{prenorm_linear.1} parent=0 // pred_region
    _
  $region21: #{prenorm_linear.1} parent=0 // pred_fallthru
    _

</llo_original>
